<compile_context>
chip_gen: v7x
topology: tpu7x:2x2x1
jax: 0.10.0
libtpu: 0.0.40
codegen_flags: <defaults>
</compile_context>

<pallas_src>
import jax
import jax.numpy as jnp
from jax.experimental import pallas as pl
from jax.experimental.pallas import tpu as pltpu

HIDDEN = 256


def _round_up(x, m):
    return ((x + m - 1) // m) * m


def _choose_tile_b(B, max_tile=2048):
    """128-aligned batch tile: big enough to amortize per-grid-step overhead,
    small enough that the grid stays >= 2 at large B (both v7x TCs busy)."""
    if B <= 128:
        return B                       # full-dim block (always legal)
    half = _round_up(pl.cdiv(B, 2), 128)
    return max(128, min(max_tile, half))


def _value_kernel(obs_ref, w1_ref, b1_ref, w2_ref, b2_ref, w3_ref, b3_ref,
                  out_ref):
    # In-kernel cast of obs to the MXU compute dtype (bf16 by default).
    x = obs_ref[...].astype(w1_ref.dtype)
    # Layer 1: (tb, D) @ (D, 256) on the MXU, f32 accumulation; bias/ReLU f32.
    h = jnp.dot(x, w1_ref[...], preferred_element_type=jnp.float32)
    h = jnp.maximum(h + b1_ref[...], 0.0)
    # Layer 2: (tb, 256) @ (256, 256); LHS cast to weight compute dtype,
    # f32 accumulator.
    h = jnp.dot(h.astype(w2_ref.dtype), w2_ref[...],
                preferred_element_type=jnp.float32)
    h = jnp.maximum(h + b2_ref[...], 0.0)
    # Layer 3: out_features == 1 -> skip the MXU (would waste 255/256 lanes).
    # VPU multiply by the (1, 256) w3 row + cross-lane reduce (XLU slot).
    v = jnp.sum(h * w3_ref[...], axis=-1)              # (tb,)
    v = v + b3_ref[0, 0]                                # SMEM scalar bias
    # Lane-dense store: (1, tb) row of the (1, B) output.
    out_ref[...] = v[None, :].astype(out_ref.dtype)


def prepare_params(params, compute_dtype=jnp.bfloat16):
    """One-time parameter prep (call once, NOT per forward step):
    cast the two matmul weights to the MXU compute dtype (bf16 default,
    None -> f32 to bit-match the reference) and reshape w3 to a (1, 256) row.
    Biases and w3 stay f32 (VPU epilogue path)."""
    cd = jnp.float32 if compute_dtype is None else compute_dtype
    return {
        "w1": params["w1"].astype(cd),                       # (D, 256)
        "b1": params["b1"].astype(jnp.float32),              # (1, 256)
        "w2": params["w2"].astype(cd),                       # (256, 256)
        "b2": params["b2"].astype(jnp.float32),              # (1, 256)
        "w3_row": params["w3"].reshape(1, HIDDEN).astype(jnp.float32),
        "b3": params["b3"].reshape(1, 1).astype(jnp.float32),
    }


def value_forward(obs, kp, *, max_batch_tile=2048):
    """obs: (B, repr_dim) float32.  kp: output of prepare_params()."""
    B, D = obs.shape
    w1, b1 = kp["w1"], kp["b1"]
    w2, b2 = kp["w2"], kp["b2"]
    w3_row, b3 = kp["w3_row"], kp["b3"]
    assert w1.shape == (D, HIDDEN)

    tile_b = _choose_tile_b(B, max_batch_tile)
    grid = (pl.cdiv(B, tile_b),)

    # Advisory cost for XLA's scheduler.
    flops = 2 * B * (D * HIDDEN + HIDDEN * HIDDEN + HIDDEN)
    bytes_accessed = (
        obs.size * obs.dtype.itemsize
        + w1.size * w1.dtype.itemsize + w2.size * w2.dtype.itemsize
        + (b1.size + b2.size + w3_row.size + b3.size) * 4
        + B * 4)
    cost = pl.CostEstimate(flops=flops, transcendentals=0,
                           bytes_accessed=bytes_accessed)

    # VMEM guard (matters only for large repr_dim; trips first on v7x's
    # 64 MiB physical / 32 MiB scoped VMEM).  Resident weights + double-
    # buffered obs/out tiles + headroom for the (tile_b, 256) f32 activations.
    resident_bytes = (w1.size * w1.dtype.itemsize
                      + w2.size * w2.dtype.itemsize
                      + (b1.size + b2.size + w3_row.size) * 4)
    pipelined_bytes = 2 * (tile_b * D * obs.dtype.itemsize + tile_b * 4)
    interm_bytes = 2 * tile_b * HIDDEN * 4
    need = resident_bytes + pipelined_bytes + interm_bytes
    cp_kwargs = dict(dimension_semantics=("parallel",))
    if need > 24 * 2**20:
        cp_kwargs["vmem_limit_bytes"] = int(min(60 * 2**20, need + 8 * 2**20))

    def _resident(a):
        # Full-array block, same block every grid step -> stays in VMEM.
        return pl.BlockSpec(a.shape, lambda i: (0, 0))

    out_row = pl.pallas_call(
        _value_kernel,
        out_shape=jax.ShapeDtypeStruct((1, B), jnp.float32),
        grid_spec=pltpu.PrefetchScalarGridSpec(
            num_scalar_prefetch=0,
            grid=grid,
            in_specs=[
                pl.BlockSpec((tile_b, D), lambda i: (i, 0)),   # obs tile
                _resident(w1),
                _resident(b1),
                _resident(w2),
                _resident(b2),
                _resident(w3_row),
                pl.BlockSpec(memory_space=pltpu.MemorySpace.SMEM),  # b3 scalar
            ],
            out_specs=pl.BlockSpec((1, tile_b), lambda i: (0, i)),
        ),
        compiler_params=pltpu.CompilerParams(**cp_kwargs),
        cost_estimate=cost,
    )(obs, w1, b1, w2, b2, w3_row, b3)

    return out_row.reshape(B, 1)


def init_params(key, repr_dim):
    """Deterministic init mirroring nn.Linear shapes (weights transposed)."""
    k1, k2, k3, k4, k5, k6 = jax.random.split(key, 6)

    def lin(kw, kb, fan_in, fan_out):
        bound = 1.0 / jnp.sqrt(fan_in)
        w = jax.random.uniform(kw, (fan_in, fan_out), jnp.float32, -bound, bound)
        b = jax.random.uniform(kb, (1, fan_out), jnp.float32, -bound, bound)
        return w, b

    w1, b1 = lin(k1, k2, repr_dim, HIDDEN)
    w2, b2 = lin(k3, k4, HIDDEN, HIDDEN)
    w3, b3 = lin(k5, k6, HIDDEN, 1)
    return {"w1": w1, "b1": b1, "w2": w2, "b2": b2, "w3": w3, "b3": b3}


def value_reference(obs, p):
    h = jnp.maximum(obs @ p["w1"] + p["b1"], 0.0)
    h = jnp.maximum(h @ p["w2"] + p["b2"], 0.0)
    return h @ p["w3"] + p["b3"]


# TODO(synk): save()/load() (torch checkpoint I/O) are host-side utilities with
# no kernel equivalent; omitted.

if __name__ == "__main__":
    key = jax.random.PRNGKey(0)
    k_obs, k_params = jax.random.split(key)

    repr_dim = 32
    params = init_params(k_params, repr_dim)

    # f32 path, tiny batch (single full-dim tile, D not a multiple of 128):
    # must match the f32 reference tightly.
    obs = jax.random.normal(k_obs, (8, repr_dim), dtype=jnp.float32)
    kp_f32 = prepare_params(params, compute_dtype=None)
    out = jax.block_until_ready(value_forward(obs, kp_f32))
    ref = value_reference(obs, params)
    assert out.shape == (8, 1)
    assert jnp.allclose(out, ref, atol=1e-5, rtol=1e-5)

    # Default bf16 MXU path with a ragged batch: grid = 2 (both v7x TCs busy),
    # partial last block on both the obs read and the lane-dense output write.
    big_batch = 300
    big_obs = jax.random.normal(k_obs, (big_batch, repr_dim), dtype=jnp.float32)
    kp_bf16 = prepare_params(params)             # bf16 w1/w2, prepared once
    out_bf16 = jax.block_until_ready(value_forward(big_obs, kp_bf16))
    ref_big = value_reference(big_obs, params)
    assert out_bf16.shape == (big_batch, 1)
    assert jnp.allclose(out_bf16, ref_big, atol=5e-2, rtol=5e-2)

    print("KERNEL_OK")
</pallas_src>

<mosaic_0001>
module attributes {stable_mosaic.version = 11 : i64} {
  func.func @_value_kernel(%arg0: i32, %arg1: memref<8x32xf32, #tpu.memory_space<vmem>>, %arg2: memref<32x256xf32, #tpu.memory_space<vmem>>, %arg3: memref<1x256xf32, #tpu.memory_space<vmem>>, %arg4: memref<256x256xf32, #tpu.memory_space<vmem>>, %arg5: memref<1x256xf32, #tpu.memory_space<vmem>>, %arg6: memref<1x256xf32, #tpu.memory_space<vmem>>, %arg7: memref<1x1xf32, #tpu.memory_space<smem>>, %arg8: memref<1x8xf32, #tpu.memory_space<vmem>>) attributes {dimension_semantics = [#tpu.dimension_semantics<parallel>], iteration_bounds = array<i64: 1>, scalar_prefetch = 0 : i64, scratch_operands = 0 : i64, tpu.core_type = #tpu.core_type<tc>, window_params = [{transform_indices = @transform_0, window_bounds = array<i64: 8, 32>}, {pipeline_mode = #tpu.pipeline_mode<synchronous>, transform_indices = @transform_1, window_bounds = array<i64: 32, 256>}, {pipeline_mode = #tpu.pipeline_mode<synchronous>, transform_indices = @transform_2, window_bounds = array<i64: 1, 256>}, {pipeline_mode = #tpu.pipeline_mode<synchronous>, transform_indices = @transform_3, window_bounds = array<i64: 256, 256>}, {pipeline_mode = #tpu.pipeline_mode<synchronous>, transform_indices = @transform_4, window_bounds = array<i64: 1, 256>}, {pipeline_mode = #tpu.pipeline_mode<synchronous>, transform_indices = @transform_5, window_bounds = array<i64: 1, 256>}, {transform_indices = @transform_6, window_bounds = array<i64: 1, 1>}, {transform_indices = @transform_7, window_bounds = array<i64: 1, 8>}]} {
    %c0 = arith.constant 0 : index
    %c0_0 = arith.constant 0 : index
    %0 = vector.load %arg1[%c0, %c0_0] : memref<8x32xf32, #tpu.memory_space<vmem>>, vector<8x32xf32>
    %c0_1 = arith.constant 0 : index
    %c0_2 = arith.constant 0 : index
    %1 = vector.load %arg2[%c0_1, %c0_2] : memref<32x256xf32, #tpu.memory_space<vmem>>, vector<32x256xf32>
    %cst = arith.constant dense<0.000000e+00> : vector<8x256xf32>
    %2 = tpu.matmul %0, %1, %cst {dimension_numbers = #tpu.dot_dimension_numbers<[1], [0], [0], [1], [0, 0, 1, 1], [], []>} : vector<8x32xf32>, vector<32x256xf32>, vector<8x256xf32> -> vector<8x256xf32>
    %c0_3 = arith.constant 0 : index
    %c0_4 = arith.constant 0 : index
    %3 = vector.load %arg3[%c0_3, %c0_4] : memref<1x256xf32, #tpu.memory_space<vmem>>, vector<1x256xf32>
    %4 = vector.broadcast %3 : vector<1x256xf32> to vector<8x256xf32>
    %5 = arith.addf %2, %4 : vector<8x256xf32>
    %cst_5 = arith.constant 0.000000e+00 : f32
    %6 = vector.broadcast %cst_5 : f32 to vector<8x256xf32>
    %7 = arith.maximumf %5, %6 : vector<8x256xf32>
    %c0_6 = arith.constant 0 : index
    %c0_7 = arith.constant 0 : index
    %8 = vector.load %arg4[%c0_6, %c0_7] : memref<256x256xf32, #tpu.memory_space<vmem>>, vector<256x256xf32>
    %cst_8 = arith.constant dense<0.000000e+00> : vector<8x256xf32>
    %9 = tpu.matmul %7, %8, %cst_8 {dimension_numbers = #tpu.dot_dimension_numbers<[1], [0], [0], [1], [0, 0, 1, 1], [], []>} : vector<8x256xf32>, vector<256x256xf32>, vector<8x256xf32> -> vector<8x256xf32>
    %c0_9 = arith.constant 0 : index
    %c0_10 = arith.constant 0 : index
    %10 = vector.load %arg5[%c0_9, %c0_10] : memref<1x256xf32, #tpu.memory_space<vmem>>, vector<1x256xf32>
    %11 = vector.broadcast %10 : vector<1x256xf32> to vector<8x256xf32>
    %12 = arith.addf %9, %11 : vector<8x256xf32>
    %cst_11 = arith.constant 0.000000e+00 : f32
    %13 = vector.broadcast %cst_11 : f32 to vector<8x256xf32>
    %14 = arith.maximumf %12, %13 : vector<8x256xf32>
    %c0_12 = arith.constant 0 : index
    %c0_13 = arith.constant 0 : index
    %15 = vector.load %arg6[%c0_12, %c0_13] : memref<1x256xf32, #tpu.memory_space<vmem>>, vector<1x256xf32>
    %16 = vector.broadcast %15 : vector<1x256xf32> to vector<8x256xf32>
    %17 = arith.mulf %14, %16 : vector<8x256xf32>
    %cst_14 = arith.constant dense<0.000000e+00> : vector<8xf32>
    %18 = vector.multi_reduction <add>, %17, %cst_14 [1] : vector<8x256xf32> to vector<8xf32>
    %c0_15 = arith.constant 0 : index
    %c0_16 = arith.constant 0 : index
    %19 = memref.load %arg7[%c0_15, %c0_16] : memref<1x1xf32, #tpu.memory_space<smem>>
    %20 = vector.broadcast %19 : f32 to vector<8xf32>
    %21 = arith.addf %18, %20 : vector<8xf32>
    %22 = vector.shape_cast %21 : vector<8xf32> to vector<1x8xf32>
    %c0_17 = arith.constant 0 : index
    %c0_18 = arith.constant 0 : index
    %23 = vector.load %arg8[%c0_17, %c0_18] : memref<1x8xf32, #tpu.memory_space<vmem>>, vector<1x8xf32>
    tpu.vector_store %arg8[%c0_17, %c0_18], %22 {strides = array<i32>} : memref<1x8xf32, #tpu.memory_space<vmem>>, vector<1x8xf32>,
    return
  }
  func.func @transform_0(%arg0: i32) -> (i32, i32) {
    %c0_i32 = arith.constant 0 : i32
    %c0_i32_0 = arith.constant 0 : i32
    return %arg0, %c0_i32 : i32, i32
  }
  func.func @transform_1(%arg0: i32) -> (i32, i32) {
    %c0_i32 = arith.constant 0 : i32
    %c0_i32_0 = arith.constant 0 : i32
    %c0_i32_1 = arith.constant 0 : i32
    return %c0_i32, %c0_i32_0 : i32, i32
  }
  func.func @transform_2(%arg0: i32) -> (i32, i32) {
    %c0_i32 = arith.constant 0 : i32
    %c0_i32_0 = arith.constant 0 : i32
    %c0_i32_1 = arith.constant 0 : i32
    return %c0_i32, %c0_i32_0 : i32, i32
  }
  func.func @transform_3(%arg0: i32) -> (i32, i32) {
    %c0_i32 = arith.constant 0 : i32
    %c0_i32_0 = arith.constant 0 : i32
    %c0_i32_1 = arith.constant 0 : i32
    return %c0_i32, %c0_i32_0 : i32, i32
  }
  func.func @transform_4(%arg0: i32) -> (i32, i32) {
    %c0_i32 = arith.constant 0 : i32
    %c0_i32_0 = arith.constant 0 : i32
    %c0_i32_1 = arith.constant 0 : i32
    return %c0_i32, %c0_i32_0 : i32, i32
  }
  func.func @transform_5(%arg0: i32) -> (i32, i32) {
    %c0_i32 = arith.constant 0 : i32
    %c0_i32_0 = arith.constant 0 : i32
    %c0_i32_1 = arith.constant 0 : i32
    return %c0_i32, %c0_i32_0 : i32, i32
  }
  func.func @transform_6(%arg0: i32) -> (i32, i32) {
    %c0_i32 = arith.constant 0 : i32
    %c0_i32_0 = arith.constant 0 : i32
    %c0_i32_1 = arith.constant 0 : i32
    return %c0_i32, %c0_i32_0 : i32, i32
  }
  func.func @transform_7(%arg0: i32) -> (i32, i32) {
    %c0_i32 = arith.constant 0 : i32
    %c0_i32_0 = arith.constant 0 : i32
    return %c0_i32, %arg0 : i32, i32
  }
}

</mosaic_0001>

<llo_original>
// kernel: tpu_custom_call.1
$region0: #{tpu_custom_call.1}
  #allocation0 [shape = 'u32[]', space=smem, size = 0x4, offset = 0x4, fixed_abs, tag = 'smem constant byte address 0x4 - core index']
  #allocation1 [shape = 'u32[144,128]{1,0:T(1,128)}', space=vmem, size = 0x12000, scoped, tag = 'internal scratch']
  #allocation2 [shape = 'f32[1,1]{1,0:T(1,128)S(6)}', space=smem, size = 0x200, scoped, tag = 'scoped memory for tpu_custom_call.1']
  %s0 = inlined_call_operand.hbm [shape: f32[8,32], index: 0, kind: input, shape index: {}]
  %s1 = inlined_call_operand.hbm [shape: f32[32,256], index: 1, kind: input, shape index: {}]
  %s2 = inlined_call_operand.vmem [shape: f32[1,256], index: 2, kind: input, shape index: {}]
  %s3 = inlined_call_operand.hbm [shape: f32[256,256], index: 3, kind: input, shape index: {}]
  %s4 = inlined_call_operand.vmem [shape: f32[1,256], index: 4, kind: input, shape index: {}]
  %s5 = inlined_call_operand.vmem [shape: f32[1,256], index: 5, kind: input, shape index: {}]
  %s6 = inlined_call_operand.<no memory space> [shape: f32[1,1], index: 6, kind: input, shape index: {}]
  %s7 = inlined_call_operand.hbm [shape: f32[1,8], index: 7, kind: output, shape index: {}]
  %s8 = sld [smem:[#allocation0]]
  $region50: #{tpu_custom_call.1} parent=0
    _
  %s10 = ssub.s32 1, %s8
  %s11 = scalar_select 0, %s10, %s8
  %12 = sst [smem:[#allocation2]] %s6
  $region1: #{tpu_custom_call.1} parent=0
    #allocation3 [shape = 'u8[4096]{0}', space=vmem, size = 0x1000, scoped, tag = 'input window, operand 0, single buffered']
    #allocation4 [shape = 's32[1]{0}', space=sflag, size = 0x4, scoped, tag = 'scoped memory for tpu_custom_call.1']
    #allocation5 [shape = 's32[1]{0}', space=sflag, size = 0x4, scoped, tag = 'scoped memory for tpu_custom_call.1']
    #allocation6 [shape = 'u8[32768]{0}', space=vmem, size = 0x8000, scoped, tag = 'input window, operand 1, single buffered']
    #allocation7 [shape = 's32[1]{0}', space=sflag, size = 0x4, scoped, tag = 'scoped memory for tpu_custom_call.1']
    #allocation8 [shape = 'u8[262144]{0}', space=vmem, size = 0x40000, scoped, tag = 'input window, operand 3, single buffered']
    #allocation9 [shape = 'u8[512]{0}', space=vmem, size = 0x400, scoped, tag = 'output window, operand 0, single buffered']
    %13 = vsyncpa [#allocation4], 0
    %14 = vsyncpa [#allocation7], 0
    %15 = vsyncpa [#allocation5], 0
    // Predicated region
    $region2: #{tpu_custom_call.1} parent=1 // pred_check
      _
    $region3: #{tpu_custom_call.1} parent=1 // pred_check_branch
      %17 = sbr.rel (0) target = $region5
    $region4: #{tpu_custom_call.1} parent=1 // pred_region
      %s19 = ssub.s32 128, 128
      %20 = vsyncadd [#allocation4], %s19
      %s22 = sshll.u32 [#allocation3], 4
      %s23 = int_to_ptr.vmem [resolvable:$true] %s22
      %25 = dma.hbm_to_vmem [thread:$0]  %s0, 128, %s23, [#allocation4]
    $region5: #{tpu_custom_call.1} parent=1 // pred_fallthru
      _
    // Predicated region
    $region6: #{tpu_custom_call.1} parent=1 // pred_check
      _
    $region7: #{tpu_custom_call.1} parent=1 // pred_check_branch
      %27 = sbr.rel (0) target = $region9
    $region8: #{tpu_custom_call.1} parent=1 // pred_region
      %s29 = ssub.s32 1024, 1024
      %30 = vsyncadd [#allocation7], %s29
      %s31 = sshll.u32 [#allocation6], 4
      %s32 = int_to_ptr.vmem [resolvable:$true] %s31
      %37 = dma.hbm_to_vmem [thread:$0]  %s1, 1024, %s32, [#allocation7], 256, 256, 16
    $region9: #{tpu_custom_call.1} parent=1 // pred_fallthru
      _
    // Predicated region
    $region10: #{tpu_custom_call.1} parent=1 // pred_check
      _
    $region11: #{tpu_custom_call.1} parent=1 // pred_check_branch
      %39 = sbr.rel (0) target = $region13
    $region12: #{tpu_custom_call.1} parent=1 // pred_region
      _
    $region13: #{tpu_custom_call.1} parent=1 // pred_fallthru
      _
    // Predicated region
    $region14: #{tpu_custom_call.1} parent=1 // pred_check
      _
    $region15: #{tpu_custom_call.1} parent=1 // pred_check_branch
      %41 = sbr.rel (0) target = $region17
    $region16: #{tpu_custom_call.1} parent=1 // pred_region
      %s43 = ssub.s32 8192, 8192
      %44 = vsyncadd [#allocation7], %s43
      %s45 = sshll.u32 [#allocation8], 4
      %s46 = int_to_ptr.vmem [resolvable:$true] %s45
      %51 = dma.hbm_to_vmem [thread:$0]  %s3, 8192, %s46, [#allocation7], 256, 256, 16
    $region17: #{tpu_custom_call.1} parent=1 // pred_fallthru
      _
    // Predicated region
    $region18: #{tpu_custom_call.1} parent=1 // pred_check
      _
    $region19: #{tpu_custom_call.1} parent=1 // pred_check_branch
      %53 = sbr.rel (0) target = $region21
    $region20: #{tpu_custom_call.1} parent=1 // pred_region
      _
    $region21: #{tpu_custom_call.1} parent=1 // pred_fallthru
      _
    // Predicated region
    $region22: #{tpu_custom_call.1} parent=1 // pred_check
      _
    $region23: #{tpu_custom_call.1} parent=1 // pred_check_branch
      %55 = sbr.rel (0) target = $region25
    $region24: #{tpu_custom_call.1} parent=1 // pred_region
      _
    $region25: #{tpu_custom_call.1} parent=1 // pred_fallthru
      _
    // Predicated region
    $region26: #{tpu_custom_call.1} parent=1 // pred_check
      _
    $region27: #{tpu_custom_call.1} parent=1 // pred_check_branch
      %57 = sbr.rel (0) target = $region29
    $region28: #{tpu_custom_call.1} parent=1 // pred_region
      _
    $region29: #{tpu_custom_call.1} parent=1 // pred_fallthru
      _
    // Predicated region
    $region30: #{tpu_custom_call.1} parent=1 // pred_check
      _
    $region31: #{tpu_custom_call.1} parent=1 // pred_check_branch
      %59 = sbr.rel (0) target = $region33
    $region32: #{tpu_custom_call.1} parent=1 // pred_region
      %60 = dma.done [#allocation4], 128
    $region33: #{tpu_custom_call.1} parent=1 // pred_fallthru
      _
    // Predicated region
    $region34: #{tpu_custom_call.1} parent=1 // pred_check
      _
    $region35: #{tpu_custom_call.1} parent=1 // pred_check_branch
      %62 = sbr.rel (0) target = $region37
    $region36: #{tpu_custom_call.1} parent=1 // pred_region
      %63 = dma.done [#allocation7], 1024
    $region37: #{tpu_custom_call.1} parent=1 // pred_fallthru
      _
    // Predicated region
    $region38: #{tpu_custom_call.1} parent=1 // pred_check
      _
    $region39: #{tpu_custom_call.1} parent=1 // pred_check_branch
      %65 = sbr.rel (0) target = $region41
    $region40: #{tpu_custom_call.1} parent=1 // pred_region
      %66 = dma.done [#allocation7], 8192
    $region41: #{tpu_custom_call.1} parent=1 // pred_fallthru
      _
    %v67 = vld [vmem:[#allocation3] sm:$0xff]
    %v68 = vld [vmem:[#allocation6] sm:$0xff]
    %v69 = vld [vmem:[#allocation6 + $0x8] sm:$0xff]
    %v70 = vld [vmem:[#allocation6 + $0x10] sm:$0xff]
    %v71 = vld [vmem:[#allocation6 + $0x18] sm:$0xff]
    %v72 = vld [vmem:[#allocation6 + $0x20] sm:$0xff]
    %v73 = vld [vmem:[#allocation6 + $0x28] sm:$0xff]
    %v74 = vld [vmem:[#allocation6 + $0x30] sm:$0xff]
    %v75 = vld [vmem:[#allocation6 + $0x38] sm:$0xff]
    %v76 = vld [vmem:[%s2] sm:$0x3]
    %v78 = vlaneseq
    %v79 = vshrl.u32 %v78, 7
    %v80 = vsub.s32 0, %v79
    %v81 = vrot.slane %v76, %v80
    %v82 = vlaneseq
    %v83 = vshrl.u32 %v82, 7
    %v84 = vsub.s32 1, %v83
    %v85 = vrot.slane %v76, %v84
    %vm88 = vcmask 261120
    %v90 = vsel %vm88, %v67, 0
    %92 = vmatprep.subr.mxu0 %v69
    %93 = vmatpush1.msra.mxu0 %v68
    %94 = vmatprep.subr.mxu0 %v71
    %95 = vmatpush1.msra.mxu0 %v70
    %96 = vmatprep.subr.mxu0 %v73
    %97 = vmatpush1.msra.mxu0 %v72
    %98 = vmatprep.subr.mxu0 %v75
    %99 = vmatpush1.msra.mxu0 %v74
    %100 = vmatprep.subr.mxu0 0.0
    %101 = vmatpush1.msra.mxu0 0.0
    %102 = vmatprep.subr.mxu0 0.0
    %103 = vmatpush1.msra.mxu0 0.0
    %104 = vmatprep.subr.mxu0 0.0
    %105 = vmatpush1.msra.mxu0 0.0
    %106 = vmatprep.subr.mxu0 0.0
    %107 = vmatpush1.msra.mxu0 0.0
    %108 = vmatprep.subr.mxu0 0.0
    %109 = vmatpush1.msra.mxu0 0.0
    %110 = vmatprep.subr.mxu0 0.0
    %111 = vmatpush1.msra.mxu0 0.0
    %112 = vmatprep.subr.mxu0 0.0
    %113 = vmatpush1.msra.mxu0 0.0
    %114 = vmatprep.subr.mxu0 0.0
    %115 = vmatpush1.msra.mxu0 0.0
    %116 = vmatprep.subr.mxu0 0.0
    %117 = vmatpush1.msra.mxu0 0.0
    %118 = vmatprep.subr.mxu0 0.0
    %119 = vmatpush1.msra.mxu0 0.0
    %120 = vmatprep.subr.mxu0 0.0
    %121 = vmatpush1.msra.mxu0 0.0
    %122 = vmatprep.subr.mxu0 0.0
    %123 = vmatpush1.msra.mxu0 0.0
    %124 = vmatprep.subr.mxu0 0.0
    %125 = vmatpush1.msra.mxu0 0.0
    %126 = vmatprep.subr.mxu0 0.0
    %127 = vmatpush1.msra.mxu0 0.0
    %128 = vmatprep.subr.mxu0 0.0
    %129 = vmatpush1.msra.mxu0 0.0
    %130 = vmatprep.subr.mxu0 0.0
    %131 = vmatpush1.msra.mxu0 0.0
    %132 = vmatprep.subr.mxu0 0.0
    %133 = vmatpush1.msra.mxu0 0.0
    %134 = vmatprep.subr.mxu0 0.0
    %135 = vmatpush1.msra.mxu0 0.0
    %136 = vmatprep.subr.mxu0 0.0
    %137 = vmatpush1.msra.mxu0 0.0
    %138 = vmatprep.subr.mxu0 0.0
    %139 = vmatpush1.msra.mxu0 0.0
    %140 = vmatprep.subr.mxu0 0.0
    %141 = vmatpush1.msra.mxu0 0.0
    %142 = vmatprep.subr.mxu0 0.0
    %143 = vmatpush1.msra.mxu0 0.0
    %144 = vmatprep.subr.mxu0 0.0
    %145 = vmatpush1.msra.mxu0 0.0
    %146 = vmatprep.subr.mxu0 0.0
    %147 = vmatpush1.msra.mxu0 0.0
    %148 = vmatprep.subr.mxu0 0.0
    %149 = vmatpush1.msra.mxu0 0.0
    %150 = vmatprep.subr.mxu0 0.0
    %151 = vmatpush1.msra.mxu0 0.0
    %152 = vmatprep.subr.mxu0 0.0
    %153 = vmatpush1.msra.mxu0 0.0
    %154 = vmatprep.subr.mxu0 0.0
    %155 = vmatpush1.msra.mxu0 0.0
    %156 = vmatprep.mubr.f32.mxu0 0.0
    %157 = vmatmul.mubr.f32.gmra.mrb[0].mxu0 %v90
    %v158 = vpop.f32.mrb[0].mxu0
    %v159 = vadd.f32 %v81, %v158
    %v160 = vpop.f32.mrb[0].mxu0
    %v161 = vadd.f32 %v85, %v160
    %162 = vdwg.mxu0
    %v163 = vmax.f32 %v159, 0.0
    %v164 = vmax.f32 %v161, 0.0
    %v165 = vld [vmem:[#allocation8] sm:$0xff]
    %v166 = vld [vmem:[#allocation8 + $0x8] sm:$0xff]
    %v167 = vld [vmem:[#allocation8 + $0x10] sm:$0xff]
    %v168 = vld [vmem:[#allocation8 + $0x18] sm:$0xff]
    %v169 = vld [vmem:[#allocation8 + $0x20] sm:$0xff]
    %v170 = vld [vmem:[#allocation8 + $0x28] sm:$0xff]
    %v171 = vld [vmem:[#allocation8 + $0x30] sm:$0xff]
    %v172 = vld [vmem:[#allocation8 + $0x38] sm:$0xff]
    %v173 = vld [vmem:[#allocation8 + $0x40] sm:$0xff]
    %v174 = vld [vmem:[#allocation8 + $0x48] sm:$0xff]
    %v175 = vld [vmem:[#allocation8 + $0x50] sm:$0xff]
    %v176 = vld [vmem:[#allocation8 + $0x58] sm:$0xff]
    %v177 = vld [vmem:[#allocation8 + $0x60] sm:$0xff]
    %v178 = vld [vmem:[#allocation8 + $0x68] sm:$0xff]
    %v179 = vld [vmem:[#allocation8 + $0x70] sm:$0xff]
    %v180 = vld [vmem:[#allocation8 + $0x78] sm:$0xff]
    %v181 = vld [vmem:[#allocation8 + $0x80] sm:$0xff]
    %v182 = vld [vmem:[#allocation8 + $0x88] sm:$0xff]
    %v183 = vld [vmem:[#allocation8 + $0x90] sm:$0xff]
    %v184 = vld [vmem:[#allocation8 + $0x98] sm:$0xff]
    %v185 = vld [vmem:[#allocation8 + $0xa0] sm:$0xff]
    %v186 = vld [vmem:[#allocation8 + $0xa8] sm:$0xff]
    %v187 = vld [vmem:[#allocation8 + $0xb0] sm:$0xff]
    %v188 = vld [vmem:[#allocation8 + $0xb8] sm:$0xff]
    %v189 = vld [vmem:[#allocation8 + $0xc0] sm:$0xff]
    %v190 = vld [vmem:[#allocation8 + $0xc8] sm:$0xff]
    %v191 = vld [vmem:[#allocation8 + $0xd0] sm:$0xff]
    %v192 = vld [vmem:[#allocation8 + $0xd8] sm:$0xff]
    %v193 = vld [vmem:[#allocation8 + $0xe0] sm:$0xff]
    %v194 = vld [vmem:[#allocation8 + $0xe8] sm:$0xff]
    %v195 = vld [vmem:[#allocation8 + $0xf0] sm:$0xff]
    %v196 = vld [vmem:[#allocation8 + $0xf8] sm:$0xff]
    %v197 = vld [vmem:[#allocation8 + $0x100] sm:$0xff]
    %v198 = vld [vmem:[#allocation8 + $0x108] sm:$0xff]
    %v199 = vld [vmem:[#allocation8 + $0x110] sm:$0xff]
    %v200 = vld [vmem:[#allocation8 + $0x118] sm:$0xff]
    %v201 = vld [vmem:[#allocation8 + $0x120] sm:$0xff]
    %v202 = vld [vmem:[#allocation8 + $0x128] sm:$0xff]
    %v203 = vld [vmem:[#allocation8 + $0x130] sm:$0xff]
    %v204 = vld [vmem:[#allocation8 + $0x138] sm:$0xff]
    %v205 = vld [vmem:[#allocation8 + $0x140] sm:$0xff]
    %v206 = vld [vmem:[#allocation8 + $0x148] sm:$0xff]
    %v207 = vld [vmem:[#allocation8 + $0x150] sm:$0xff]
    %v208 = vld [vmem:[#allocation8 + $0x158] sm:$0xff]
    %v209 = vld [vmem:[#allocation8 + $0x160] sm:$0xff]
    %v210 = vld [vmem:[#allocation8 + $0x168] sm:$0xff]
    %v211 = vld [vmem:[#allocation8 + $0x170] sm:$0xff]
    %v212 = vld [vmem:[#allocation8 + $0x178] sm:$0xff]
    %v213 = vld [vmem:[#allocation8 + $0x180] sm:$0xff]
    %v214 = vld [vmem:[#allocation8 + $0x188] sm:$0xff]
    %v215 = vld [vmem:[#allocation8 + $0x190] sm:$0xff]
    %v216 = vld [vmem:[#allocation8 + $0x198] sm:$0xff]
    %v217 = vld [vmem:[#allocation8 + $0x1a0] sm:$0xff]
    %v218 = vld [vmem:[#allocation8 + $0x1a8] sm:$0xff]
    %v219 = vld [vmem:[#allocation8 + $0x1b0] sm:$0xff]
    %v220 = vld [vmem:[#allocation8 + $0x1b8] sm:$0xff]
    %v221 = vld [vmem:[#allocation8 + $0x1c0] sm:$0xff]
    %v222 = vld [vmem:[#allocation8 + $0x1c8] sm:$0xff]
    %v223 = vld [vmem:[#allocation8 + $0x1d0] sm:$0xff]
    %v224 = vld [vmem:[#allocation8 + $0x1d8] sm:$0xff]
    %v225 = vld [vmem:[#allocation8 + $0x1e0] sm:$0xff]
    %v226 = vld [vmem:[#allocation8 + $0x1e8] sm:$0xff]
    %v227 = vld [vmem:[#allocation8 + $0x1f0] sm:$0xff]
    %v228 = vld [vmem:[#allocation8 + $0x1f8] sm:$0xff]
    %v229 = vld [vmem:[%s4] sm:$0x3]
    %v231 = vlaneseq
    %v232 = vshrl.u32 %v231, 7
    %v233 = vsub.s32 0, %v232
    %v234 = vrot.slane %v229, %v233
    %v235 = vlaneseq
    %v236 = vshrl.u32 %v235, 7
    %v237 = vsub.s32 1, %v236
    %v238 = vrot.slane %v229, %v237
    %241 = vmatprep.subr.mxu0 %v166
    %242 = vmatpush1.msra.mxu0 %v165
    %243 = vmatprep.subr.mxu0 %v168
    %244 = vmatpush1.msra.mxu0 %v167
    %245 = vmatprep.subr.mxu0 %v170
    %246 = vmatpush1.msra.mxu0 %v169
    %247 = vmatprep.subr.mxu0 %v172
    %248 = vmatpush1.msra.mxu0 %v171
    %249 = vmatprep.subr.mxu0 %v174
    %250 = vmatpush1.msra.mxu0 %v173
    %251 = vmatprep.subr.mxu0 %v176
    %252 = vmatpush1.msra.mxu0 %v175
    %253 = vmatprep.subr.mxu0 %v178
    %254 = vmatpush1.msra.mxu0 %v177
    %255 = vmatprep.subr.mxu0 %v180
    %256 = vmatpush1.msra.mxu0 %v179
    %257 = vmatprep.subr.mxu0 %v182
    %258 = vmatpush1.msra.mxu0 %v181
    %259 = vmatprep.subr.mxu0 %v184
    %260 = vmatpush1.msra.mxu0 %v183
    %261 = vmatprep.subr.mxu0 %v186
    %262 = vmatpush1.msra.mxu0 %v185
    %263 = vmatprep.subr.mxu0 %v188
    %264 = vmatpush1.msra.mxu0 %v187
    %265 = vmatprep.subr.mxu0 %v190
    %266 = vmatpush1.msra.mxu0 %v189
    %267 = vmatprep.subr.mxu0 %v192
    %268 = vmatpush1.msra.mxu0 %v191
    %269 = vmatprep.subr.mxu0 %v194
    %270 = vmatpush1.msra.mxu0 %v193
    %271 = vmatprep.subr.mxu0 %v196
    %272 = vmatpush1.msra.mxu0 %v195
    %273 = vmatprep.subr.mxu0 %v198
    %274 = vmatpush1.msra.mxu0 %v197
    %275 = vmatprep.subr.mxu0 %v200
    %276 = vmatpush1.msra.mxu0 %v199
    %277 = vmatprep.subr.mxu0 %v202
    %278 = vmatpush1.msra.mxu0 %v201
    %279 = vmatprep.subr.mxu0 %v204
    %280 = vmatpush1.msra.mxu0 %v203
    %281 = vmatprep.subr.mxu0 %v206
    %282 = vmatpush1.msra.mxu0 %v205
    %283 = vmatprep.subr.mxu0 %v208
    %284 = vmatpush1.msra.mxu0 %v207
    %285 = vmatprep.subr.mxu0 %v210
    %286 = vmatpush1.msra.mxu0 %v209
    %287 = vmatprep.subr.mxu0 %v212
    %288 = vmatpush1.msra.mxu0 %v211
    %289 = vmatprep.subr.mxu0 %v214
    %290 = vmatpush1.msra.mxu0 %v213
    %291 = vmatprep.subr.mxu0 %v216
    %292 = vmatpush1.msra.mxu0 %v215
    %293 = vmatprep.subr.mxu0 %v218
    %294 = vmatpush1.msra.mxu0 %v217
    %295 = vmatprep.subr.mxu0 %v220
    %296 = vmatpush1.msra.mxu0 %v219
    %297 = vmatprep.subr.mxu0 %v222
    %298 = vmatpush1.msra.mxu0 %v221
    %299 = vmatprep.subr.mxu0 %v224
    %300 = vmatpush1.msra.mxu0 %v223
    %301 = vmatprep.subr.mxu0 %v226
    %302 = vmatpush1.msra.mxu0 %v225
    %303 = vmatprep.subr.mxu0 %v228
    %304 = vmatpush1.msra.mxu0 %v227
    %305 = vmatprep.mubr.f32.mxu0 %v164
    %306 = vmatmul.mubr.f32.gmra.mrb[0].mxu0 %v163
    %v307 = vpop.f32.mrb[0].mxu0
    %v308 = vadd.f32 %v234, %v307
    %v309 = vpop.f32.mrb[0].mxu0
    %v310 = vadd.f32 %v238, %v309
    %311 = vdwg.mxu0
    %v312 = vmax.f32 %v308, 0.0
    %v313 = vmax.f32 %v310, 0.0
    %v314 = vld [vmem:[%s5] sm:$0x3]
    %v316 = vlaneseq
    %v317 = vshrl.u32 %v316, 7
    %v318 = vsub.s32 0, %v317
    %v319 = vrot.slane %v314, %v318
    %v320 = vlaneseq
    %v321 = vshrl.u32 %v320, 7
    %v322 = vsub.s32 1, %v321
    %v323 = vrot.slane %v314, %v322
    %v326 = vmul.f32 %v312, %v319
    %v327 = vmul.f32 %v313, %v323
    %v328 = vadd.f32 %v326, %v327
    %329 = vadd.xlane.f32.xlu0 %v328
    %v330 = vpop.xlane.xlu0 %329
    %s331 = sld [smem:[#allocation2]]
    %v332 = vstv %s331
    %v333 = vadd.f32 %v330, %v332
    %v335 = vlaneseq
    %v336 = vand.u32 %v335, 127
    %v337 = vlaneseq
    %v338 = vshrl.u32 %v337, 7
    %v339 = vsub.s32 %v336, %v338
    %v340 = vrot.slane %v333, %v339
    %vm342 = vcmask 57344
    %343 = vst.msk [vmem:[#allocation9] sm:$0x1] %vm342, %v340
    // Predicated region
    $region42: #{tpu_custom_call.1} parent=1 // pred_check
      _
    $region43: #{tpu_custom_call.1} parent=1 // pred_check_branch
      %345 = sbr.rel (0) target = $region45
    $region44: #{tpu_custom_call.1} parent=1 // pred_region
      %s347 = ssub.s32 16, 16
      %348 = vsyncadd [#allocation5], %s347
      %s350 = sshll.u32 [#allocation9], 4
      %s351 = int_to_ptr.vmem [resolvable:$true] %s350
      %353 = dma.vmem_to_hbm [thread:$0]  %s351, 16, %s7, [#allocation5]
    $region45: #{tpu_custom_call.1} parent=1 // pred_fallthru
      _
    // Predicated region
    $region46: #{tpu_custom_call.1} parent=1 // pred_check
      _
    $region47: #{tpu_custom_call.1} parent=1 // pred_check_branch
      %355 = sbr.rel (0) target = $region49
    $region48: #{tpu_custom_call.1} parent=1 // pred_region
      %356 = dma.done [#allocation5], 16
    $region49: #{tpu_custom_call.1} parent=1 // pred_fallthru
      _
    %357 = vsyncpa [#allocation4], 1
    %358 = vsyncpa [#allocation7], 1
    %359 = vsyncpa [#allocation5], 1

</llo_original>
